<compile_context>
chip_gen: v6e
topology: v6e:2x2x1
jax: 0.10.0
libtpu: 0.0.40
codegen_flags: <defaults>
</compile_context>

<pallas_src>
import jax
import jax.numpy as jnp
from jax.experimental import pallas as pl
from jax.experimental.pallas import tpu as pltpu


# --------------------------------------------------------------------------- #
# Pallas kernel: single HBM -> HBM DMA identity copy.
# --------------------------------------------------------------------------- #
def _hbm_copy_kernel(x_hbm_ref, o_hbm_ref, sem):
    # Pure DMA: no VMEM staging, no vector load/store, no grid-step overhead.
    cp = pltpu.make_async_copy(x_hbm_ref, o_hbm_ref, sem)
    cp.start()
    cp.wait()


def _identity_hbm_copy(x: jax.Array) -> jax.Array:
    """Copy x -> new array via one whole-array HBM->HBM DMA (no grid, no VMEM)."""
    return pl.pallas_call(
        _hbm_copy_kernel,
        out_shape=jax.ShapeDtypeStruct(x.shape, x.dtype),
        in_specs=[pl.BlockSpec(memory_space=pl.ANY)],
        out_specs=pl.BlockSpec(memory_space=pl.ANY),
        scratch_shapes=[pltpu.SemaphoreType.DMA],
    )(x)


_identity_hbm_copy_jit = jax.jit(_identity_hbm_copy)


# --------------------------------------------------------------------------- #
# Forward wrapper.
# --------------------------------------------------------------------------- #
def edd_forward(x: jax.Array, *, force_kernel: bool = False) -> jax.Array:
    """Parameter-free forward of EDDModule.

    Default (fast) path: the op is a pure identity, so return x unchanged —
    zero HBM traffic, zero dispatch overhead (the review's top recommendation).

    force_kernel=True routes through a real Pallas kernel: a single
    HBM->HBM DMA copy that runs at the DMA/HBM roofline on v5e/v6e/v7x without
    touching scoped VMEM.  Used for validation / to exercise the Pallas path.
    """
    if not force_kernel:
        return x
    return _identity_hbm_copy_jit(x)


# --------------------------------------------------------------------------- #
# Plain-Python mirror of the EDDModule base class (no parameters).
# --------------------------------------------------------------------------- #
class EDDModuleJAX:
    DEVICE = ""

    def __init__(self):
        self._device = self.DEVICE
        self._params = {}  # EDDModule.__init__ registers no parameters.

    # --- state-dict plumbing (mirrors resume/save; empty dict here) -------
    def state_dict(self):
        return dict(self._params)

    def resume(self, state_dicts, per_layer: bool = False):
        if not per_layer:
            self._params = dict(state_dicts)
        else:
            pretrained = {k: v for k, v in state_dicts.items() if k in self._params}
            self._params.update(pretrained)

    def save(self, state_dicts=None):
        # Synthetic kernel: never touches the filesystem; always return dict.
        return self.state_dict()

    # --- forward -----------------------------------------------------------
    def forward(self, x, *, force_kernel: bool = False):
        # Abstract in PyTorch; here: parameter-free identity pass.
        return edd_forward(x, force_kernel=force_kernel)

    __call__ = forward


if __name__ == "__main__":
    key = jax.random.PRNGKey(0)
    # Small NCHW input consistent with a conv-style EDD architecture.
    x = jax.random.normal(key, (2, 4, 16, 16), dtype=jnp.float32)

    module = EDDModuleJAX()
    # Deterministic "parameter" init: base class has none — state dict is empty.
    module.resume(module.save())

    # 1) Default fast path: identity returned directly (no pallas_call).
    y_fast = module(x)
    y_fast = jax.block_until_ready(y_fast)

    # 2) Pallas kernel path: single HBM->HBM DMA copy, run once for validation.
    y_kernel = module(x, force_kernel=True)
    y_kernel = jax.block_until_ready(y_kernel)

    assert y_fast.shape == x.shape and y_fast.dtype == x.dtype
    assert y_kernel.shape == x.shape and y_kernel.dtype == x.dtype
    assert bool(jnp.allclose(y_fast, x))
    assert bool(jnp.allclose(y_kernel, x))

    print("KERNEL_OK")
</pallas_src>

<mosaic_0001>
module attributes {stable_mosaic.version = 11 : i64} {
  func.func @_hbm_copy_kernel(%arg0: memref<2x4x16x16xf32, #tpu.memory_space<any>>, %arg1: memref<2x4x16x16xf32, #tpu.memory_space<any>>, %arg2: memref<!tpu.dma_semaphore, #tpu.memory_space<semaphore_mem>>) attributes {dimension_semantics = [], scalar_prefetch = 0 : i64, scratch_operands = 1 : i64, tpu.core_type = #tpu.core_type<tc>} {
    tpu.enqueue_dma source(%arg0 : memref<2x4x16x16xf32, #tpu.memory_space<any>>) target(%arg1 : memref<2x4x16x16xf32, #tpu.memory_space<any>>) target_semaphore(%arg2 : memref<!tpu.dma_semaphore, #tpu.memory_space<semaphore_mem>>)
    tpu.wait_dma2 semaphore(%arg2 : memref<!tpu.dma_semaphore, #tpu.memory_space<semaphore_mem>>) src(%arg0 : memref<2x4x16x16xf32, #tpu.memory_space<any>>) dst(%arg1 : memref<2x4x16x16xf32, #tpu.memory_space<any>>)
    return
  }
}

</mosaic_0001>

<llo_original>
// kernel: _identity_hbm_copy.1
$region0: #{_identity_hbm_copy.1}
  #allocation0 [shape = 'u32[]', space=smem, size = 0x4, offset = 0x4, fixed_abs, tag = 'smem constant byte address 0x4 - core index']
  #allocation1 [shape = 'u32[144,128]{1,0:T(1,128)}', space=vmem, size = 0x12000, scoped, tag = 'internal scratch']
  #allocation2 [shape = 's32[1]{0}', space=sflag, size = 0x4, scoped, tag = 'scratch operand']
  #allocation3 [shape = 's32[]', space=sflag, size = 0x4, offset = 0, fixed_abs, tag = 'sflag constant byte address 0x0 - dummy sync flag']
  #allocation4 [shape = 'u32[0]{0}', space=smem, size = 0, offset = 0, fixed_abs, tag = 'smem constant byte address 0x0 - null']
  %s0 = inlined_call_operand.hbm [shape: f32[2,4,16,16], index: 0, kind: input, shape index: {}]
  %s1 = inlined_call_operand.hbm [shape: f32[2,4,16,16], index: 1, kind: output, shape index: {}]
  %s2 = sld [smem:[#allocation0]]
  $region2: #{_identity_hbm_copy.1} parent=0
    _
  %s4 = ssub.s32 1, %s2
  %s5 = scalar_select 0, %s4, %s2
  %s7 = sshll.u32 1, 14
  %s8 = sxor.u32 4294967295, %s7
  %12 = dma.general %s0, 2048, %s1, [#allocation2], 131072, [#allocation4], 0, 0
  %s13 = smul.u32 2, 4
  %s14 = smul.u32 %s13, 16
  %s15 = smul.u32 %s14, 1
  %s16 = sshll.u32 %s15, 4
  %17 = dma.done [#allocation2], %s16
  %18 = vsyncmov [#allocation2]
  %s19 = vpop.sfrf %18
  %p20 = scmp.eq.s32.totalorder %s19, 0
  %p21 = pneg %p20
  %23 = shalt.err (%p21)

</llo_original>
